<compile_context>
chip_gen: v6e
topology: v6e:2x2x1
jax: 0.10.0
libtpu: 0.0.40
codegen_flags: <defaults>
</compile_context>

<pallas_src>
import functools

import jax
import jax.numpy as jnp
from jax.experimental import pallas as pl
from jax.experimental.pallas import tpu as pltpu


def _round_up(x, m):
    return pl.cdiv(x, m) * m


def _fused_transition_kernel(state_ref, act_ref, ws_ref, wa_ref, b_ref, out_ref,
                             *, compute_dtype):
    # state_ref: (TF, fold*D)             f32 (cast to bf16 on the VPU, which has
    # act_ref  : (TF, fold*K_act)         f32  huge slack in this mem-bound kernel)
    # ws_ref   : (fold*D, fold*D_out)     bf16, block-diagonal kron(I_fold, W_state)
    # wa_ref   : (fold*K_act, fold*D_out) bf16, block-diagonal kron(I_fold, W_act)
    # b_ref    : (1, fold*D_out)          f32
    s = state_ref[...].astype(compute_dtype)
    a = act_ref[...].astype(compute_dtype)
    acc = jnp.dot(s, ws_ref[...], preferred_element_type=jnp.float32)
    acc = acc + jnp.dot(a, wa_ref[...], preferred_element_type=jnp.float32)
    out_ref[...] = (acc + b_ref[...]).astype(out_ref.dtype)


def transition_model_forward(state_repre, actions, params, *, tile_m=8192,
                             compute_dtype=jnp.bfloat16):
    """state_repre: (B, S, D) f32, actions: (B, S, A, n_actions) f32."""
    B, S, A, n_act = actions.shape
    D = state_repre.shape[-1]
    wa, ba, wf, bf = params["wa"], params["ba"], params["wf"], params["bf"]
    E = wa.shape[1]
    D_out = wf.shape[1]
    K_act = A * n_act

    # ---- Algebraic fusion of the two Linears (tiny f32 precompute) ----
    wf_state = wf[:D]                                    # (D, D_out)
    wf_emb = wf[D:].reshape(A, E, D_out)                 # per-agent (E, D_out) blocks
    # actions_flat @ w_act == action_embed_flat @ wf[D:]  (bias folded separately)
    w_act = jnp.einsum("ke,aeo->ako", wa, wf_emb).reshape(K_act, D_out)
    b_comb = bf + ba @ wf_emb.sum(axis=0)                # (1, D_out)

    # ---- Fold rows into the lane dim: lane-dense 128-wide output ----
    fold = 128 // D_out if (D_out <= 128 and 128 % D_out == 0) else 1
    eye = jnp.eye(fold, dtype=wf.dtype)
    ws_big = jnp.kron(eye, wf_state).astype(compute_dtype)   # (fold*D, fold*D_out)
    wa_big = jnp.kron(eye, w_act).astype(compute_dtype)      # (fold*K_act, fold*D_out)
    b_big = jnp.tile(b_comb, (1, fold)).astype(jnp.float32)  # (1, fold*D_out)

    # ---- Pad rows only to the fold/sublane granularity (NOT a tile multiple) ----
    M = B * S
    row_align = fold * 16
    M_pad = _round_up(M, row_align)

    state_flat = state_repre.reshape(M, D)
    actions_flat = actions.reshape(M, K_act)
    if M_pad != M:
        pad = M_pad - M
        state_flat = jnp.pad(state_flat, ((0, pad), (0, 0)))
        actions_flat = jnp.pad(actions_flat, ((0, pad), (0, 0)))

    Mf = M_pad // fold
    state_f = state_flat.reshape(Mf, fold * D)            # free contiguous reshape
    act_f = actions_flat.reshape(Mf, fold * K_act)

    # ---- Tile selection: big tiles to amortize per-step overhead; keep >=2
    #      (even when possible) grid steps so v7x can use both TensorCores. ----
    num_steps = pl.cdiv(M_pad, max(min(tile_m, M_pad), row_align))
    if M_pad // row_align >= 2:
        num_steps = max(num_steps, 2)
        if num_steps % 2:
            num_steps += 1
    tile = _round_up(pl.cdiv(M_pad, num_steps), row_align)
    tf = tile // fold
    grid = (pl.cdiv(Mf, tf),)                             # ragged last block masked by Pallas

    out_f = pl.pallas_call(
        functools.partial(_fused_transition_kernel, compute_dtype=compute_dtype),
        out_shape=jax.ShapeDtypeStruct((Mf, fold * D_out), jnp.float32),
        grid_spec=pltpu.PrefetchScalarGridSpec(
            num_scalar_prefetch=0,
            grid=grid,
            in_specs=[
                pl.BlockSpec((tf, fold * D), lambda i: (i, 0)),                # folded state (f32)
                pl.BlockSpec((tf, fold * K_act), lambda i: (i, 0)),            # folded actions (f32)
                pl.BlockSpec((fold * D, fold * D_out), lambda i: (0, 0)),      # W_state (blockdiag, bf16)
                pl.BlockSpec((fold * K_act, fold * D_out), lambda i: (0, 0)),  # W_act (blockdiag, bf16)
                pl.BlockSpec((1, fold * D_out), lambda i: (0, 0)),             # fused bias (f32)
            ],
            out_specs=pl.BlockSpec((tf, fold * D_out), lambda i: (i, 0)),
        ),
        compiler_params=pltpu.CompilerParams(
            dimension_semantics=("parallel",),            # shard row axis across v7x's 2 TCs
            vmem_limit_bytes=32 * 1024 * 1024),           # ~6 MB used at tf=2048; safe everywhere
    )(state_f, act_f, ws_big, wa_big, b_big)

    out = out_f.reshape(M_pad, D_out)
    if M_pad != M:
        out = out[:M]
    return out.reshape(B, S, D_out).astype(state_repre.dtype)


def init_params(key, *, n_actions, action_embed_dim, n_agents, state_repre_dim,
                latent_model_type="squared"):
    """Deterministic synthetic init mirroring the nn.Linear shapes in __init__."""
    k1, k2, k3, k4 = jax.random.split(key, 4)
    in_f = action_embed_dim * n_agents + state_repre_dim
    if latent_model_type == "squared":
        out_f = state_repre_dim
    elif latent_model_type == "kl":
        out_f = state_repre_dim * 2
    else:
        raise ValueError(f"Unknown latent model type: {latent_model_type}")
    # PyTorch Linear stores W as (out, in); kernel uses (in, out), so build transposed.
    wa = jax.random.normal(k1, (n_actions, action_embed_dim), jnp.float32) * 0.1
    ba = jax.random.normal(k2, (1, action_embed_dim), jnp.float32) * 0.1
    wf = jax.random.normal(k3, (in_f, out_f), jnp.float32) * 0.1
    bf = jax.random.normal(k4, (1, out_f), jnp.float32) * 0.1
    return {"wa": wa, "ba": ba, "wf": wf, "bf": bf}


def reference_forward(state_repre, actions, params):
    """Pure-JAX f32 reference with the original (unfused) weights."""
    B, S, A, n_act = actions.shape
    emb = actions @ params["wa"] + params["ba"][0]        # (B,S,A,E)
    emb = emb.reshape(B, S, A * emb.shape[-1])
    fwd_in = jnp.concatenate([state_repre, emb], axis=-1)
    return fwd_in @ params["wf"] + params["bf"][0]


if __name__ == "__main__":
    # Small shapes consistent with the module's forward.
    B, S, A = 2, 8, 4
    n_actions = 6
    action_embed_dim = 8
    state_repre_dim = 32

    key = jax.random.PRNGKey(0)
    k_state, k_act, k_param = jax.random.split(key, 3)

    state_repre = jax.random.normal(k_state, (B, S, state_repre_dim), jnp.float32)
    actions = jax.random.normal(k_act, (B, S, A, n_actions), jnp.float32)

    params = init_params(
        k_param,
        n_actions=n_actions,
        action_embed_dim=action_embed_dim,
        n_agents=A,
        state_repre_dim=state_repre_dim,
        latent_model_type="squared",
    )

    out = transition_model_forward(state_repre, actions, params)
    out = jax.block_until_ready(out)

    ref = reference_forward(state_repre, actions, params)
    assert out.shape == (B, S, state_repre_dim)
    # bf16 weights/activations inside the kernel with f32 MXU accumulation.
    assert jnp.allclose(out, ref, atol=5e-2, rtol=5e-2), (
        f"max abs err {jnp.max(jnp.abs(out - ref))}")

    print("KERNEL_OK")
</pallas_src>

<mosaic_0001>
module attributes {stable_mosaic.version = 11 : i64} {
  func.func @_fused_transition_kernel(%arg0: i32, %arg1: memref<16x128xf32, #tpu.memory_space<vmem>>, %arg2: memref<16x96xf32, #tpu.memory_space<vmem>>, %arg3: memref<128x128xbf16, #tpu.memory_space<vmem>>, %arg4: memref<96x128xbf16, #tpu.memory_space<vmem>>, %arg5: memref<1x128xf32, #tpu.memory_space<vmem>>, %arg6: memref<16x128xf32, #tpu.memory_space<vmem>>) attributes {dimension_semantics = [#tpu.dimension_semantics<parallel>], iteration_bounds = array<i64: 1>, scalar_prefetch = 0 : i64, scratch_operands = 0 : i64, tpu.core_type = #tpu.core_type<tc>, window_params = [{transform_indices = @transform_0, window_bounds = array<i64: 16, 128>}, {transform_indices = @transform_1, window_bounds = array<i64: 16, 96>}, {pipeline_mode = #tpu.pipeline_mode<synchronous>, transform_indices = @transform_2, window_bounds = array<i64: 128, 128>}, {pipeline_mode = #tpu.pipeline_mode<synchronous>, transform_indices = @transform_3, window_bounds = array<i64: 96, 128>}, {pipeline_mode = #tpu.pipeline_mode<synchronous>, transform_indices = @transform_4, window_bounds = array<i64: 1, 128>}, {transform_indices = @transform_5, window_bounds = array<i64: 16, 128>}]} {
    %c0 = arith.constant 0 : index
    %c0_0 = arith.constant 0 : index
    %0 = vector.load %arg1[%c0, %c0_0] : memref<16x128xf32, #tpu.memory_space<vmem>>, vector<16x128xf32>
    %1 = arith.truncf %0 : vector<16x128xf32> to vector<16x128xbf16>
    %c0_1 = arith.constant 0 : index
    %c0_2 = arith.constant 0 : index
    %2 = vector.load %arg2[%c0_1, %c0_2] : memref<16x96xf32, #tpu.memory_space<vmem>>, vector<16x96xf32>
    %3 = arith.truncf %2 : vector<16x96xf32> to vector<16x96xbf16>
    %c0_3 = arith.constant 0 : index
    %c0_4 = arith.constant 0 : index
    %4 = vector.load %arg3[%c0_3, %c0_4] : memref<128x128xbf16, #tpu.memory_space<vmem>>, vector<128x128xbf16>
    %cst = arith.constant dense<0.000000e+00> : vector<16x128xf32>
    %5 = tpu.matmul %1, %4, %cst {dimension_numbers = #tpu.dot_dimension_numbers<[1], [0], [0], [1], [0, 0, 1, 1], [], []>} : vector<16x128xbf16>, vector<128x128xbf16>, vector<16x128xf32> -> vector<16x128xf32>
    %c0_5 = arith.constant 0 : index
    %c0_6 = arith.constant 0 : index
    %6 = vector.load %arg4[%c0_5, %c0_6] : memref<96x128xbf16, #tpu.memory_space<vmem>>, vector<96x128xbf16>
    %cst_7 = arith.constant dense<0.000000e+00> : vector<16x128xf32>
    %7 = tpu.matmul %3, %6, %cst_7 {dimension_numbers = #tpu.dot_dimension_numbers<[1], [0], [0], [1], [0, 0, 1, 1], [], []>} : vector<16x96xbf16>, vector<96x128xbf16>, vector<16x128xf32> -> vector<16x128xf32>
    %8 = arith.addf %5, %7 : vector<16x128xf32>
    %c0_8 = arith.constant 0 : index
    %c0_9 = arith.constant 0 : index
    %9 = vector.load %arg5[%c0_8, %c0_9] : memref<1x128xf32, #tpu.memory_space<vmem>>, vector<1x128xf32>
    %10 = vector.broadcast %9 : vector<1x128xf32> to vector<16x128xf32>
    %11 = arith.addf %8, %10 : vector<16x128xf32>
    %c0_10 = arith.constant 0 : index
    %c0_11 = arith.constant 0 : index
    %12 = vector.load %arg6[%c0_10, %c0_11] : memref<16x128xf32, #tpu.memory_space<vmem>>, vector<16x128xf32>
    tpu.vector_store %arg6[%c0_10, %c0_11], %11 {strides = array<i32>} : memref<16x128xf32, #tpu.memory_space<vmem>>, vector<16x128xf32>,
    return
  }
  func.func @transform_0(%arg0: i32) -> (i32, i32) {
    %c0_i32 = arith.constant 0 : i32
    %c0_i32_0 = arith.constant 0 : i32
    return %arg0, %c0_i32 : i32, i32
  }
  func.func @transform_1(%arg0: i32) -> (i32, i32) {
    %c0_i32 = arith.constant 0 : i32
    %c0_i32_0 = arith.constant 0 : i32
    return %arg0, %c0_i32 : i32, i32
  }
  func.func @transform_2(%arg0: i32) -> (i32, i32) {
    %c0_i32 = arith.constant 0 : i32
    %c0_i32_0 = arith.constant 0 : i32
    %c0_i32_1 = arith.constant 0 : i32
    return %c0_i32, %c0_i32_0 : i32, i32
  }
  func.func @transform_3(%arg0: i32) -> (i32, i32) {
    %c0_i32 = arith.constant 0 : i32
    %c0_i32_0 = arith.constant 0 : i32
    %c0_i32_1 = arith.constant 0 : i32
    return %c0_i32, %c0_i32_0 : i32, i32
  }
  func.func @transform_4(%arg0: i32) -> (i32, i32) {
    %c0_i32 = arith.constant 0 : i32
    %c0_i32_0 = arith.constant 0 : i32
    %c0_i32_1 = arith.constant 0 : i32
    return %c0_i32, %c0_i32_0 : i32, i32
  }
  func.func @transform_5(%arg0: i32) -> (i32, i32) {
    %c0_i32 = arith.constant 0 : i32
    %c0_i32_0 = arith.constant 0 : i32
    return %arg0, %c0_i32 : i32, i32
  }
}

</mosaic_0001>

<llo_original>
// kernel: tpu_custom_call.1
$region0: #{tpu_custom_call.1}
  #allocation0 [shape = 'u32[]', space=smem, size = 0x4, offset = 0x4, fixed_abs, tag = 'smem constant byte address 0x4 - core index']
  #allocation1 [shape = 'u32[144,128]{1,0:T(1,128)}', space=vmem, size = 0x12000, scoped, tag = 'internal scratch']
  %s0 = inlined_call_operand.hbm [shape: f32[16,128], index: 0, kind: input, shape index: {}]
  %s1 = inlined_call_operand.hbm [shape: f32[16,96], index: 1, kind: input, shape index: {}]
  %s2 = inlined_call_operand.hbm [shape: bf16[128,128], index: 2, kind: input, shape index: {}]
  %s3 = inlined_call_operand.hbm [shape: bf16[96,128], index: 3, kind: input, shape index: {}]
  %s4 = inlined_call_operand.vmem [shape: f32[1,128], index: 4, kind: input, shape index: {}]
  %s5 = inlined_call_operand.hbm [shape: f32[16,128], index: 5, kind: output, shape index: {}]
  %s6 = sld [smem:[#allocation0]]
  $region46: #{tpu_custom_call.1} parent=0
    _
  %s8 = ssub.s32 1, %s6
  %s9 = scalar_select 0, %s8, %s6
  $region1: #{tpu_custom_call.1} parent=0
    #allocation2 [shape = 'u8[8192]{0}', space=vmem, size = 0x2000, scoped, tag = 'input window, operand 0, single buffered']
    #allocation3 [shape = 's32[1]{0}', space=sflag, size = 0x4, scoped, tag = 'scoped memory for tpu_custom_call.1']
    #allocation4 [shape = 's32[1]{0}', space=sflag, size = 0x4, scoped, tag = 'scoped memory for tpu_custom_call.1']
    #allocation5 [shape = 'u8[8192]{0}', space=vmem, size = 0x2000, scoped, tag = 'input window, operand 1, single buffered']
    #allocation6 [shape = 's32[1]{0}', space=sflag, size = 0x4, scoped, tag = 'scoped memory for tpu_custom_call.1']
    #allocation7 [shape = 'u8[32768]{0}', space=vmem, size = 0x8000, scoped, tag = 'input window, operand 2, single buffered']
    #allocation8 [shape = 'u8[24576]{0}', space=vmem, size = 0x6000, scoped, tag = 'input window, operand 3, single buffered']
    #allocation9 [shape = 's32[1]{0}', space=sflag, size = 0x4, scoped, tag = 'scoped memory for tpu_custom_call.1']
    #allocation10 [shape = 'u8[8192]{0}', space=vmem, size = 0x2000, scoped, tag = 'output window, operand 0, single buffered']
    %10 = vsyncpa [#allocation3], 0
    %11 = vsyncpa [#allocation6], 0
    %12 = vsyncpa [#allocation9], 0
    %13 = vsyncpa [#allocation4], 0
    // Predicated region
    $region2: #{tpu_custom_call.1} parent=1 // pred_check
      _
    $region3: #{tpu_custom_call.1} parent=1 // pred_check_branch
      %15 = sbr.rel (0) target = $region5
    $region4: #{tpu_custom_call.1} parent=1 // pred_region
      %s17 = ssub.s32 256, 256
      %18 = vsyncadd [#allocation3], %s17
      %s19 = sshll.u32 [#allocation2], 4
      %s20 = int_to_ptr.vmem [resolvable:$true] %s19
      %25 = dma.hbm_to_vmem [thread:$0]  %s0, 256, %s20, [#allocation3], 128, 128, 8
    $region5: #{tpu_custom_call.1} parent=1 // pred_fallthru
      _
    // Predicated region
    $region6: #{tpu_custom_call.1} parent=1 // pred_check
      _
    $region7: #{tpu_custom_call.1} parent=1 // pred_check_branch
      %27 = sbr.rel (0) target = $region9
    $region8: #{tpu_custom_call.1} parent=1 // pred_region
      %s29 = ssub.s32 256, 256
      %30 = vsyncadd [#allocation6], %s29
      %s31 = sshll.u32 [#allocation5], 4
      %s32 = int_to_ptr.vmem [resolvable:$true] %s31
      %37 = dma.hbm_to_vmem [thread:$0]  %s1, 256, %s32, [#allocation6], 128, 128, 8
    $region9: #{tpu_custom_call.1} parent=1 // pred_fallthru
      _
    // Predicated region
    $region10: #{tpu_custom_call.1} parent=1 // pred_check
      _
    $region11: #{tpu_custom_call.1} parent=1 // pred_check_branch
      %39 = sbr.rel (0) target = $region13
    $region12: #{tpu_custom_call.1} parent=1 // pred_region
      %s41 = ssub.s32 1024, 1024
      %42 = vsyncadd [#allocation6], %s41
      %s43 = sshll.u32 [#allocation7], 4
      %s44 = int_to_ptr.vmem [resolvable:$true] %s43
      %49 = dma.hbm_to_vmem [thread:$0]  %s2, 1024, %s44, [#allocation6], 64, 64, 4
    $region13: #{tpu_custom_call.1} parent=1 // pred_fallthru
      _
    // Predicated region
    $region14: #{tpu_custom_call.1} parent=1 // pred_check
      _
    $region15: #{tpu_custom_call.1} parent=1 // pred_check_branch
      %51 = sbr.rel (0) target = $region17
    $region16: #{tpu_custom_call.1} parent=1 // pred_region
      %s53 = ssub.s32 768, 768
      %54 = vsyncadd [#allocation9], %s53
      %s55 = sshll.u32 [#allocation8], 4
      %s56 = int_to_ptr.vmem [resolvable:$true] %s55
      %61 = dma.hbm_to_vmem [thread:$0]  %s3, 768, %s56, [#allocation9], 64, 64, 4
    $region17: #{tpu_custom_call.1} parent=1 // pred_fallthru
      _
    // Predicated region
    $region18: #{tpu_custom_call.1} parent=1 // pred_check
      _
    $region19: #{tpu_custom_call.1} parent=1 // pred_check_branch
      %63 = sbr.rel (0) target = $region21
    $region20: #{tpu_custom_call.1} parent=1 // pred_region
      _
    $region21: #{tpu_custom_call.1} parent=1 // pred_fallthru
      _
    // Predicated region
    $region22: #{tpu_custom_call.1} parent=1 // pred_check
      _
    $region23: #{tpu_custom_call.1} parent=1 // pred_check_branch
      %65 = sbr.rel (0) target = $region25
    $region24: #{tpu_custom_call.1} parent=1 // pred_region
      %66 = dma.done [#allocation3], 256
    $region25: #{tpu_custom_call.1} parent=1 // pred_fallthru
      _
    // Predicated region
    $region26: #{tpu_custom_call.1} parent=1 // pred_check
      _
    $region27: #{tpu_custom_call.1} parent=1 // pred_check_branch
      %68 = sbr.rel (0) target = $region29
    $region28: #{tpu_custom_call.1} parent=1 // pred_region
      %69 = dma.done [#allocation6], 256
    $region29: #{tpu_custom_call.1} parent=1 // pred_fallthru
      _
    // Predicated region
    $region30: #{tpu_custom_call.1} parent=1 // pred_check
      _
    $region31: #{tpu_custom_call.1} parent=1 // pred_check_branch
      %71 = sbr.rel (0) target = $region33
    $region32: #{tpu_custom_call.1} parent=1 // pred_region
      %72 = dma.done [#allocation6], 1024
    $region33: #{tpu_custom_call.1} parent=1 // pred_fallthru
      _
    // Predicated region
    $region34: #{tpu_custom_call.1} parent=1 // pred_check
      _
    $region35: #{tpu_custom_call.1} parent=1 // pred_check_branch
      %74 = sbr.rel (0) target = $region37
    $region36: #{tpu_custom_call.1} parent=1 // pred_region
      %75 = dma.done [#allocation9], 768
    $region37: #{tpu_custom_call.1} parent=1 // pred_fallthru
      _
    %v77 = vld [vmem:[#allocation2] sm:$0xff]
    %v78 = vld [vmem:[#allocation2 + $0x8] sm:$0xff]
    %v79 = vpack.c.bf16 %v78, %v77
    %v80 = vld [vmem:[#allocation5] sm:$0xff]
    %v81 = vld [vmem:[#allocation5 + $0x8] sm:$0xff]
    %v82 = vpack.c.bf16 %v81, %v80
    %v83 = vld [vmem:[#allocation7] sm:$0xf]
    %v84 = vld [vmem:[#allocation7 + $0x4] sm:$0xf]
    %v85 = vld [vmem:[#allocation7 + $0x8] sm:$0xf]
    %v86 = vld [vmem:[#allocation7 + $0xc] sm:$0xf]
    %v87 = vld [vmem:[#allocation7 + $0x10] sm:$0xf]
    %v88 = vld [vmem:[#allocation7 + $0x14] sm:$0xf]
    %v89 = vld [vmem:[#allocation7 + $0x18] sm:$0xf]
    %v90 = vld [vmem:[#allocation7 + $0x1c] sm:$0xf]
    %v91 = vld [vmem:[#allocation7 + $0x20] sm:$0xf]
    %v92 = vld [vmem:[#allocation7 + $0x24] sm:$0xf]
    %v93 = vld [vmem:[#allocation7 + $0x28] sm:$0xf]
    %v94 = vld [vmem:[#allocation7 + $0x2c] sm:$0xf]
    %v95 = vld [vmem:[#allocation7 + $0x30] sm:$0xf]
    %v96 = vld [vmem:[#allocation7 + $0x34] sm:$0xf]
    %v97 = vld [vmem:[#allocation7 + $0x38] sm:$0xf]
    %v98 = vld [vmem:[#allocation7 + $0x3c] sm:$0xf]
    %v99 = vld [vmem:[#allocation8] sm:$0xf]
    %v100 = vld [vmem:[#allocation8 + $0x4] sm:$0xf]
    %v101 = vld [vmem:[#allocation8 + $0x8] sm:$0xf]
    %v102 = vld [vmem:[#allocation8 + $0xc] sm:$0xf]
    %v103 = vld [vmem:[#allocation8 + $0x10] sm:$0xf]
    %v104 = vld [vmem:[#allocation8 + $0x14] sm:$0xf]
    %v105 = vld [vmem:[#allocation8 + $0x18] sm:$0xf]
    %v106 = vld [vmem:[#allocation8 + $0x1c] sm:$0xf]
    %v107 = vld [vmem:[#allocation8 + $0x20] sm:$0xf]
    %v108 = vld [vmem:[#allocation8 + $0x24] sm:$0xf]
    %v109 = vld [vmem:[#allocation8 + $0x28] sm:$0xf]
    %v110 = vld [vmem:[#allocation8 + $0x2c] sm:$0xf]
    %v123 = vunpack.c.l.b16 %v99
    %v124 = vunpack.c.l.b16 %v100
    %v125 = vunpack.c.l.b16 %v101
    %v126 = vunpack.c.l.b16 %v102
    %v127 = vunpack.c.l.b16 %v103
    %v128 = vunpack.c.l.b16 %v104
    %v129 = vunpack.c.l.b16 %v105
    %v130 = vunpack.c.l.b16 %v106
    %v131 = vunpack.c.l.b16 %v107
    %v132 = vunpack.c.l.b16 %v108
    %v133 = vunpack.c.l.b16 %v109
    %v134 = vunpack.c.l.b16 %v110
    %v135 = vpack.c.b16 %v124, %v123
    %v136 = vpack.c.b16 %v126, %v125
    %v137 = vpack.c.b16 %v128, %v127
    %v138 = vpack.c.b16 %v130, %v129
    %v139 = vpack.c.b16 %v132, %v131
    %v140 = vpack.c.b16 %v134, %v133
    %vm147 = vcmask 785408
    %v149 = vsel %vm147, %v82, 0
    %151 = vmatprep.subr.bf16.mxu0 0
    %152 = vmatpush1.bf16.msra.mxu0 0
    %153 = vmatprep.subr.bf16.mxu0 0
    %154 = vmatpush1.bf16.msra.mxu0 0
    %155 = vmatprep.subr.bf16.mxu0 0
    %156 = vmatpush1.bf16.msra.mxu0 %v140
    %157 = vmatprep.subr.bf16.mxu0 0
    %158 = vmatpush1.bf16.msra.mxu0 %v139
    %159 = vmatprep.subr.bf16.mxu0 0
    %160 = vmatpush1.bf16.msra.mxu0 %v138
    %161 = vmatprep.subr.bf16.mxu0 0
    %162 = vmatpush1.bf16.msra.mxu0 %v137
    %163 = vmatprep.subr.bf16.mxu0 0
    %164 = vmatpush1.bf16.msra.mxu0 %v136
    %165 = vmatprep.subr.bf16.mxu0 0
    %166 = vmatpush1.bf16.msra.mxu0 %v135
    %167 = vmatprep.subr.bf16.mxu0 0
    %168 = vmatpush2.bf16.msra.mxu0 0
    %169 = vmatprep.subr.bf16.mxu0 0
    %170 = vmatpush2.bf16.msra.mxu0 0
    %171 = vmatprep.subr.bf16.mxu0 0
    %172 = vmatpush2.bf16.msra.mxu0 0
    %173 = vmatprep.subr.bf16.mxu0 0
    %174 = vmatpush2.bf16.msra.mxu0 0
    %175 = vmatprep.subr.bf16.mxu0 0
    %176 = vmatpush2.bf16.msra.mxu0 0
    %177 = vmatprep.subr.bf16.mxu0 0
    %178 = vmatpush2.bf16.msra.mxu0 0
    %179 = vmatprep.subr.bf16.mxu0 0
    %180 = vmatpush2.bf16.msra.mxu0 0
    %181 = vmatprep.subr.bf16.mxu0 0
    %182 = vmatpush2.bf16.msra.mxu0 0
    %183 = vmatprep.mubr.bf16.mxu0 0
    %184 = vmatmul.mubr.bf16.gmra.mxu0 %v149
    %v185 = vpop.f32.mrf.mxu0
    %v186 = vadd.f32 0.0, %v185
    %v187 = vpop.f32.mrf.mxu0
    %v188 = vpop.f32.mrf.mxu0
    %v189 = vadd.f32 0.0, %v188
    %v190 = vpop.f32.mrf.mxu0
    %191 = vdwg.mxu0
    %v208 = vunpack.c.l.b16 %v83
    %v209 = vunpack.c.l.b16 %v84
    %v210 = vunpack.c.l.b16 %v85
    %v211 = vunpack.c.l.b16 %v86
    %v212 = vunpack.c.l.b16 %v87
    %v213 = vunpack.c.l.b16 %v88
    %v214 = vunpack.c.l.b16 %v89
    %v215 = vunpack.c.l.b16 %v90
    %v216 = vunpack.c.l.b16 %v91
    %v217 = vunpack.c.l.b16 %v92
    %v218 = vunpack.c.l.b16 %v93
    %v219 = vunpack.c.l.b16 %v94
    %v220 = vunpack.c.l.b16 %v95
    %v221 = vunpack.c.l.b16 %v96
    %v222 = vunpack.c.l.b16 %v97
    %v223 = vunpack.c.l.b16 %v98
    %v224 = vpack.c.b16 %v209, %v208
    %v225 = vpack.c.b16 %v211, %v210
    %v226 = vpack.c.b16 %v213, %v212
    %v227 = vpack.c.b16 %v215, %v214
    %v228 = vpack.c.b16 %v217, %v216
    %v229 = vpack.c.b16 %v219, %v218
    %v230 = vpack.c.b16 %v221, %v220
    %v231 = vpack.c.b16 %v223, %v222
    %240 = vmatprep.subr.bf16.mxu0 0
    %241 = vmatpush1.bf16.msra.mxu0 %v231
    %242 = vmatprep.subr.bf16.mxu0 0
    %243 = vmatpush1.bf16.msra.mxu0 %v230
    %244 = vmatprep.subr.bf16.mxu0 0
    %245 = vmatpush1.bf16.msra.mxu0 %v229
    %246 = vmatprep.subr.bf16.mxu0 0
    %247 = vmatpush1.bf16.msra.mxu0 %v228
    %248 = vmatprep.subr.bf16.mxu0 0
    %249 = vmatpush1.bf16.msra.mxu0 %v227
    %250 = vmatprep.subr.bf16.mxu0 0
    %251 = vmatpush1.bf16.msra.mxu0 %v226
    %252 = vmatprep.subr.bf16.mxu0 0
    %253 = vmatpush1.bf16.msra.mxu0 %v225
    %254 = vmatprep.subr.bf16.mxu0 0
    %255 = vmatpush1.bf16.msra.mxu0 %v224
    %256 = vmatprep.subr.bf16.mxu0 0
    %257 = vmatpush2.bf16.msra.mxu0 0
    %258 = vmatprep.subr.bf16.mxu0 0
    %259 = vmatpush2.bf16.msra.mxu0 0
    %260 = vmatprep.subr.bf16.mxu0 0
    %261 = vmatpush2.bf16.msra.mxu0 0
    %262 = vmatprep.subr.bf16.mxu0 0
    %263 = vmatpush2.bf16.msra.mxu0 0
    %264 = vmatprep.subr.bf16.mxu0 0
    %265 = vmatpush2.bf16.msra.mxu0 0
    %266 = vmatprep.subr.bf16.mxu0 0
    %267 = vmatpush2.bf16.msra.mxu0 0
    %268 = vmatprep.subr.bf16.mxu0 0
    %269 = vmatpush2.bf16.msra.mxu0 0
    %270 = vmatprep.subr.bf16.mxu0 0
    %271 = vmatpush2.bf16.msra.mxu0 0
    %272 = vmatprep.mubr.bf16.mxu0 0
    %273 = vmatmul.mubr.bf16.gmra.mxu0 %v79
    %v274 = vpop.f32.mrf.mxu0
    %v275 = vadd.f32 %v186, %v274
    %v276 = vpop.f32.mrf.mxu0
    %v277 = vpop.f32.mrf.mxu0
    %v278 = vadd.f32 %v189, %v277
    %v279 = vpop.f32.mrf.mxu0
    %280 = vdwg.mxu0
    %v281 = vld [vmem:[%s4] sm:$0x1]
    %v283 = vlaneseq
    %v284 = vshrl.u32 %v283, 7
    %v285 = vsub.s32 0, %v284
    %v286 = vrot.slane %v281, %v285
    %v288 = vadd.f32 %v275, %v286
    %v289 = vadd.f32 %v278, %v286
    %290 = vst [vmem:[#allocation10] sm:$0xff] %v288
    %291 = vst [vmem:[#allocation10 + $0x8] sm:$0xff] %v289
    // Predicated region
    $region38: #{tpu_custom_call.1} parent=1 // pred_check
      _
    $region39: #{tpu_custom_call.1} parent=1 // pred_check_branch
      %293 = sbr.rel (0) target = $region41
    $region40: #{tpu_custom_call.1} parent=1 // pred_region
      %s295 = ssub.s32 256, 256
      %296 = vsyncadd [#allocation4], %s295
      %s297 = sshll.u32 [#allocation10], 4
      %s298 = int_to_ptr.vmem [resolvable:$true] %s297
      %303 = dma.vmem_to_hbm [thread:$0]  %s298, 256, %s5, [#allocation4], 128, 128, 8
    $region41: #{tpu_custom_call.1} parent=1 // pred_fallthru
      _
    // Predicated region
    $region42: #{tpu_custom_call.1} parent=1 // pred_check
      _
    $region43: #{tpu_custom_call.1} parent=1 // pred_check_branch
      %305 = sbr.rel (0) target = $region45
    $region44: #{tpu_custom_call.1} parent=1 // pred_region
      %306 = dma.done [#allocation4], 256
    $region45: #{tpu_custom_call.1} parent=1 // pred_fallthru
      _
    %307 = vsyncpa [#allocation3], 1
    %308 = vsyncpa [#allocation6], 1
    %309 = vsyncpa [#allocation9], 1
    %310 = vsyncpa [#allocation4], 1

</llo_original>
